<compile_context>
chip_gen: v5e
topology: v5e:2x2
jax: 0.10.0
libtpu: 0.0.40
codegen_flags: <defaults>
</compile_context>

<pallas_src>
import functools

import jax
import jax.numpy as jnp
from jax.experimental import pallas as pl
from jax.experimental.pallas import tpu as pltpu


def _dwconv_residual_kernel(x_ref, w_ref, b_ref, o_ref, *, k, L):
    """Depthwise 1D conv (cross-correlation, 'same' zero pad) + bias + residual.

    x_ref: (1, L, Ct)  input tile (one batch element, one channel tile)
    w_ref: (k, Ct)     depthwise taps (PyTorch weight (C, 1, k) transposed)
    b_ref: (1, Ct)     bias
    o_ref: (1, L, Ct)  output tile
    """
    x = x_ref[0]                                   # (L, Ct), original dtype
    pad = k // 2

    # Row indices, built once (broadcasts are not CSE'd — keep out of the loop).
    rows = jax.lax.broadcasted_iota(jnp.int32, x.shape, 0)

    acc = jnp.zeros(x.shape, jnp.float32)
    for t in range(k):                             # static, unrolled
        d = t - pad                                # out[l] += w[t] * x[l + d]
        if d == 0:
            xs = x
        else:
            # Sublane rotation on the XLU; wrapped rows emulate the zero pad
            # via a mask + select (VPU) instead of materializing shifted copies.
            xs = pltpu.roll(x, (-d) % L, axis=0)
            src = rows + d
            xs = jnp.where((src >= 0) & (src < L), xs, jnp.zeros_like(xs))
        # Cast inside the multiply; only the accumulator lives in f32.
        acc = acc + xs.astype(jnp.float32) * w_ref[t].astype(jnp.float32)

    acc = acc + b_ref[0].astype(jnp.float32)                   # bias
    o_ref[0] = (acc + x.astype(jnp.float32)).astype(o_ref.dtype)   # residual


def depthwise_conv_pos_enc(x, w, b, *, max_ct=512):
    """x: (B, L, C), w: (k, C), b: (1, C) -> (B, L, C)."""
    B, L, C = x.shape
    k = w.shape[0]
    assert k % 2 == 1, "k must be odd for 'same' padding + residual"
    assert k // 2 < L, "kernel half-width must be smaller than sequence length"

    # Lane-dense channel tiling: pad C up to a multiple of 128 and pick the
    # largest channel tile (multiple of 128, <= max_ct) that divides it.
    Cp = ((C + 127) // 128) * 128
    ct = 128
    for m in range(max_ct // 128, 0, -1):
        cand = m * 128
        if Cp % cand == 0:
            ct = cand
            break

    if Cp != C:
        x = jnp.pad(x, ((0, 0), (0, 0), (0, Cp - C)))
        w = jnp.pad(w, ((0, 0), (0, Cp - C)))
        b = jnp.pad(b, ((0, 0), (0, Cp - C)))

    # VMEM budget: double-buffered in/out blocks + f32 intermediates, with
    # headroom; capped at 64 MiB so the same choice is valid on v7x.
    itemsize = jnp.dtype(x.dtype).itemsize
    est = (2 * 2 * L * ct * itemsize            # 2x double-buffered in + out
           + 6 * L * ct * 4                     # f32 temporaries in the kernel
           + 2 * (k + 1) * ct * itemsize)       # weights + bias (negligible)
    vmem_limit = int(min(64 * 1024 * 1024, max(2 * est, 16 * 1024 * 1024)))

    out = pl.pallas_call(
        functools.partial(_dwconv_residual_kernel, k=k, L=L),
        out_shape=jax.ShapeDtypeStruct((B, L, Cp), x.dtype),
        grid=(B, Cp // ct),
        in_specs=[
            pl.BlockSpec((1, L, ct), lambda i, j: (i, 0, j)),
            pl.BlockSpec((k, ct), lambda i, j: (0, j)),
            pl.BlockSpec((1, ct), lambda i, j: (0, j)),
        ],
        out_specs=pl.BlockSpec((1, L, ct), lambda i, j: (i, 0, j)),
        compiler_params=pltpu.CompilerParams(
            dimension_semantics=("parallel", "parallel"),
            vmem_limit_bytes=vmem_limit),
    )(x, w, b)

    if Cp != C:
        out = out[:, :, :C]
    return out


@jax.jit
def conv_pos_enc_forward(q, content, params):
    """Mirrors ConvPosEnc.forward: (q, content) -> (q', content').

    Both depthwise convs run under a single jit so launch overhead is shared.
    """
    q_out = depthwise_conv_pos_enc(q, params["wq"], params["bq"])
    c_out = depthwise_conv_pos_enc(content, params["wc"], params["bc"])
    return q_out, c_out


def _reference_dwconv(x, w, b):
    """Pure-JAX reference (same semantics as PyTorch depthwise Conv1d + residual)."""
    B, L, C = x.shape
    k = w.shape[0]
    pad = k // 2
    xp = jnp.pad(x, ((0, 0), (pad, pad), (0, 0)))
    out = jnp.zeros((B, L, C), jnp.float32)
    for t in range(k):
        out = out + xp[:, t:t + L, :].astype(jnp.float32) * w[t].astype(jnp.float32)
    out = out + b[0].astype(jnp.float32) + x.astype(jnp.float32)
    return out.astype(x.dtype)


def init_params(key, dim_q, dim_content, k=3):
    """Deterministic init matching nn.Conv1d shapes: weight (C,1,k) -> stored (k,C)."""
    kq_w, kq_b, kc_w, kc_b = jax.random.split(key, 4)
    # PyTorch default: U(-1/sqrt(fan_in), 1/sqrt(fan_in)); fan_in = (in/groups)*k = k
    bound = 1.0 / (k ** 0.5)
    wq = jax.random.uniform(kq_w, (k, dim_q), jnp.float32, -bound, bound)
    bq = jax.random.uniform(kq_b, (1, dim_q), jnp.float32, -bound, bound)
    wc = jax.random.uniform(kc_w, (k, dim_content), jnp.float32, -bound, bound)
    bc = jax.random.uniform(kc_b, (1, dim_content), jnp.float32, -bound, bound)
    return {"wq": wq, "bq": bq, "wc": wc, "bc": bc}


if __name__ == "__main__":
    B = 2
    Lq, dim_q = 8, 16          # q: (B, Lq, dim_q)
    Lc, dim_content = 16, 32   # content: (B, Lc, dim_content)
    k = 3

    key = jax.random.PRNGKey(0)
    kq, kc, kp = jax.random.split(key, 3)
    q = jax.random.normal(kq, (B, Lq, dim_q), jnp.float32)
    content = jax.random.normal(kc, (B, Lc, dim_content), jnp.float32)
    params = init_params(kp, dim_q, dim_content, k)

    q_out, c_out = conv_pos_enc_forward(q, content, params)
    jax.block_until_ready((q_out, c_out))

    # correctness check against a pure-JAX reference
    q_ref = _reference_dwconv(q, params["wq"], params["bq"])
    c_ref = _reference_dwconv(content, params["wc"], params["bc"])
    assert q_out.shape == q.shape and c_out.shape == content.shape
    assert jnp.allclose(q_out, q_ref, atol=1e-5, rtol=1e-5)
    assert jnp.allclose(c_out, c_ref, atol=1e-5, rtol=1e-5)

    print("KERNEL_OK")
</pallas_src>

<mosaic_0001>
module attributes {stable_mosaic.version = 11 : i64} {
  func.func @_dwconv_residual_kernel(%arg0: i32, %arg1: i32, %arg2: memref<1x16x128xf32, #tpu.memory_space<vmem>>, %arg3: memref<3x128xf32, #tpu.memory_space<vmem>>, %arg4: memref<1x128xf32, #tpu.memory_space<vmem>>, %arg5: memref<1x16x128xf32, #tpu.memory_space<vmem>>) attributes {dimension_semantics = [#tpu.dimension_semantics<parallel>, #tpu.dimension_semantics<parallel>], iteration_bounds = array<i64: 2, 1>, scalar_prefetch = 0 : i64, scratch_operands = 0 : i64, tpu.core_type = #tpu.core_type<tc>, window_params = [{transform_indices = @transform_0, window_bounds = array<i64: 1, 16, 128>}, {transform_indices = @transform_1, window_bounds = array<i64: 3, 128>}, {transform_indices = @transform_2, window_bounds = array<i64: 1, 128>}, {transform_indices = @transform_3, window_bounds = array<i64: 1, 16, 128>}]} {
    %c0 = arith.constant 0 : index
    %c0_0 = arith.constant 0 : index
    %c0_1 = arith.constant 0 : index
    %0 = vector.load %arg2[%c0, %c0_0, %c0_1] : memref<1x16x128xf32, #tpu.memory_space<vmem>>, vector<1x16x128xf32>
    %1 = vector.shape_cast %0 : vector<1x16x128xf32> to vector<16x128xf32>
    %2 = tpu.iota {dimensions = array<i32: 0>} : vector<16x128xi32>
    %cst = arith.constant 0.000000e+00 : f32
    %3 = vector.broadcast %cst : f32 to vector<16x128xf32>
    %c1_i32 = arith.constant 1 : i32
    %4 = tpu.dynamic_rotate %1 by %c1_i32 dim 0 : vector<16x128xf32>, i32 -> vector<16x128xf32>
    %c-1_i32 = arith.constant -1 : i32
    %5 = vector.broadcast %c-1_i32 : i32 to vector<16x128xi32>
    %6 = arith.addi %2, %5 : vector<16x128xi32>
    %c0_i32 = arith.constant 0 : i32
    %7 = vector.broadcast %c0_i32 : i32 to vector<16x128xi32>
    %8 = arith.cmpi sge, %6, %7 : vector<16x128xi32>
    %c16_i32 = arith.constant 16 : i32
    %9 = vector.broadcast %c16_i32 : i32 to vector<16x128xi32>
    %10 = arith.cmpi slt, %6, %9 : vector<16x128xi32>
    %11 = arith.andi %8, %10 : vector<16x128xi1>
    %cst_2 = arith.constant 0.000000e+00 : f32
    %12 = vector.broadcast %cst_2 : f32 to vector<16x128xf32>
    %13 = arith.select %11, %4, %12 : vector<16x128xi1>, vector<16x128xf32>
    %c0_3 = arith.constant 0 : index
    %c0_4 = arith.constant 0 : index
    %14 = vector.load %arg3[%c0_3, %c0_4] : memref<3x128xf32, #tpu.memory_space<vmem>>, vector<1x128xf32>
    %15 = vector.shape_cast %14 : vector<1x128xf32> to vector<128xf32>
    %16 = vector.shape_cast %15 : vector<128xf32> to vector<1x128xf32>
    %17 = vector.broadcast %16 : vector<1x128xf32> to vector<16x128xf32>
    %18 = arith.mulf %13, %17 : vector<16x128xf32>
    %19 = arith.addf %3, %18 : vector<16x128xf32>
    %c1 = arith.constant 1 : index
    %c0_5 = arith.constant 0 : index
    %20 = vector.load %arg3[%c1, %c0_5] : memref<3x128xf32, #tpu.memory_space<vmem>>, vector<1x128xf32>
    %21 = vector.shape_cast %20 : vector<1x128xf32> to vector<128xf32>
    %22 = vector.shape_cast %21 : vector<128xf32> to vector<1x128xf32>
    %23 = vector.broadcast %22 : vector<1x128xf32> to vector<16x128xf32>
    %24 = arith.mulf %1, %23 : vector<16x128xf32>
    %25 = arith.addf %19, %24 : vector<16x128xf32>
    %c15_i32 = arith.constant 15 : i32
    %26 = tpu.dynamic_rotate %1 by %c15_i32 dim 0 : vector<16x128xf32>, i32 -> vector<16x128xf32>
    %c1_i32_6 = arith.constant 1 : i32
    %27 = vector.broadcast %c1_i32_6 : i32 to vector<16x128xi32>
    %28 = arith.addi %2, %27 : vector<16x128xi32>
    %c0_i32_7 = arith.constant 0 : i32
    %29 = vector.broadcast %c0_i32_7 : i32 to vector<16x128xi32>
    %30 = arith.cmpi sge, %28, %29 : vector<16x128xi32>
    %c16_i32_8 = arith.constant 16 : i32
    %31 = vector.broadcast %c16_i32_8 : i32 to vector<16x128xi32>
    %32 = arith.cmpi slt, %28, %31 : vector<16x128xi32>
    %33 = arith.andi %30, %32 : vector<16x128xi1>
    %cst_9 = arith.constant 0.000000e+00 : f32
    %34 = vector.broadcast %cst_9 : f32 to vector<16x128xf32>
    %35 = arith.select %33, %26, %34 : vector<16x128xi1>, vector<16x128xf32>
    %c2 = arith.constant 2 : index
    %c0_10 = arith.constant 0 : index
    %36 = vector.load %arg3[%c2, %c0_10] : memref<3x128xf32, #tpu.memory_space<vmem>>, vector<1x128xf32>
    %37 = vector.shape_cast %36 : vector<1x128xf32> to vector<128xf32>
    %38 = vector.shape_cast %37 : vector<128xf32> to vector<1x128xf32>
    %39 = vector.broadcast %38 : vector<1x128xf32> to vector<16x128xf32>
    %40 = arith.mulf %35, %39 : vector<16x128xf32>
    %41 = arith.addf %25, %40 : vector<16x128xf32>
    %c0_11 = arith.constant 0 : index
    %c0_12 = arith.constant 0 : index
    %42 = vector.load %arg4[%c0_11, %c0_12] : memref<1x128xf32, #tpu.memory_space<vmem>>, vector<1x128xf32>
    %43 = vector.shape_cast %42 : vector<1x128xf32> to vector<128xf32>
    %44 = vector.shape_cast %43 : vector<128xf32> to vector<1x128xf32>
    %45 = vector.broadcast %44 : vector<1x128xf32> to vector<16x128xf32>
    %46 = arith.addf %41, %45 : vector<16x128xf32>
    %47 = arith.addf %46, %1 : vector<16x128xf32>
    %c0_13 = arith.constant 0 : index
    %c0_14 = arith.constant 0 : index
    %c0_15 = arith.constant 0 : index
    %48 = vector.load %arg5[%c0_13, %c0_14, %c0_15] : memref<1x16x128xf32, #tpu.memory_space<vmem>>, vector<1x16x128xf32>
    %49 = vector.shape_cast %48 : vector<1x16x128xf32> to vector<16x128xf32>
    %50 = vector.shape_cast %47 : vector<16x128xf32> to vector<1x16x128xf32>
    tpu.vector_store %arg5[%c0_13, %c0_14, %c0_15], %50 {strides = array<i32>} : memref<1x16x128xf32, #tpu.memory_space<vmem>>, vector<1x16x128xf32>,
    return
  }
  func.func @transform_0(%arg0: i32, %arg1: i32) -> (i32, i32, i32) {
    %c0_i32 = arith.constant 0 : i32
    %c0_i32_0 = arith.constant 0 : i32
    return %arg0, %c0_i32, %arg1 : i32, i32, i32
  }
  func.func @transform_1(%arg0: i32, %arg1: i32) -> (i32, i32) {
    %c0_i32 = arith.constant 0 : i32
    %c0_i32_0 = arith.constant 0 : i32
    return %c0_i32, %arg1 : i32, i32
  }
  func.func @transform_2(%arg0: i32, %arg1: i32) -> (i32, i32) {
    %c0_i32 = arith.constant 0 : i32
    %c0_i32_0 = arith.constant 0 : i32
    return %c0_i32, %arg1 : i32, i32
  }
  func.func @transform_3(%arg0: i32, %arg1: i32) -> (i32, i32, i32) {
    %c0_i32 = arith.constant 0 : i32
    %c0_i32_0 = arith.constant 0 : i32
    return %arg0, %c0_i32, %arg1 : i32, i32, i32
  }
}

module attributes {stable_mosaic.version = 11 : i64} {
  func.func @_dwconv_residual_kernel(%arg0: i32, %arg1: i32, %arg2: memref<1x8x128xf32, #tpu.memory_space<vmem>>, %arg3: memref<3x128xf32, #tpu.memory_space<vmem>>, %arg4: memref<1x128xf32, #tpu.memory_space<vmem>>, %arg5: memref<1x8x128xf32, #tpu.memory_space<vmem>>) attributes {dimension_semantics = [#tpu.dimension_semantics<parallel>, #tpu.dimension_semantics<parallel>], iteration_bounds = array<i64: 2, 1>, scalar_prefetch = 0 : i64, scratch_operands = 0 : i64, tpu.core_type = #tpu.core_type<tc>, window_params = [{transform_indices = @transform_0, window_bounds = array<i64: 1, 8, 128>}, {transform_indices = @transform_1, window_bounds = array<i64: 3, 128>}, {transform_indices = @transform_2, window_bounds = array<i64: 1, 128>}, {transform_indices = @transform_3, window_bounds = array<i64: 1, 8, 128>}]} {
    %c0 = arith.constant 0 : index
    %c0_0 = arith.constant 0 : index
    %c0_1 = arith.constant 0 : index
    %0 = vector.load %arg2[%c0, %c0_0, %c0_1] : memref<1x8x128xf32, #tpu.memory_space<vmem>>, vector<1x8x128xf32>
    %1 = vector.shape_cast %0 : vector<1x8x128xf32> to vector<8x128xf32>
    %2 = tpu.iota {dimensions = array<i32: 0>} : vector<8x128xi32>
    %cst = arith.constant 0.000000e+00 : f32
    %3 = vector.broadcast %cst : f32 to vector<8x128xf32>
    %c1_i32 = arith.constant 1 : i32
    %4 = tpu.dynamic_rotate %1 by %c1_i32 dim 0 : vector<8x128xf32>, i32 -> vector<8x128xf32>
    %c-1_i32 = arith.constant -1 : i32
    %5 = vector.broadcast %c-1_i32 : i32 to vector<8x128xi32>
    %6 = arith.addi %2, %5 : vector<8x128xi32>
    %c0_i32 = arith.constant 0 : i32
    %7 = vector.broadcast %c0_i32 : i32 to vector<8x128xi32>
    %8 = arith.cmpi sge, %6, %7 : vector<8x128xi32>
    %c8_i32 = arith.constant 8 : i32
    %9 = vector.broadcast %c8_i32 : i32 to vector<8x128xi32>
    %10 = arith.cmpi slt, %6, %9 : vector<8x128xi32>
    %11 = arith.andi %8, %10 : vector<8x128xi1>
    %cst_2 = arith.constant 0.000000e+00 : f32
    %12 = vector.broadcast %cst_2 : f32 to vector<8x128xf32>
    %13 = arith.select %11, %4, %12 : vector<8x128xi1>, vector<8x128xf32>
    %c0_3 = arith.constant 0 : index
    %c0_4 = arith.constant 0 : index
    %14 = vector.load %arg3[%c0_3, %c0_4] : memref<3x128xf32, #tpu.memory_space<vmem>>, vector<1x128xf32>
    %15 = vector.shape_cast %14 : vector<1x128xf32> to vector<128xf32>
    %16 = vector.shape_cast %15 : vector<128xf32> to vector<1x128xf32>
    %17 = vector.broadcast %16 : vector<1x128xf32> to vector<8x128xf32>
    %18 = arith.mulf %13, %17 : vector<8x128xf32>
    %19 = arith.addf %3, %18 : vector<8x128xf32>
    %c1 = arith.constant 1 : index
    %c0_5 = arith.constant 0 : index
    %20 = vector.load %arg3[%c1, %c0_5] : memref<3x128xf32, #tpu.memory_space<vmem>>, vector<1x128xf32>
    %21 = vector.shape_cast %20 : vector<1x128xf32> to vector<128xf32>
    %22 = vector.shape_cast %21 : vector<128xf32> to vector<1x128xf32>
    %23 = vector.broadcast %22 : vector<1x128xf32> to vector<8x128xf32>
    %24 = arith.mulf %1, %23 : vector<8x128xf32>
    %25 = arith.addf %19, %24 : vector<8x128xf32>
    %c7_i32 = arith.constant 7 : i32
    %26 = tpu.dynamic_rotate %1 by %c7_i32 dim 0 : vector<8x128xf32>, i32 -> vector<8x128xf32>
    %c1_i32_6 = arith.constant 1 : i32
    %27 = vector.broadcast %c1_i32_6 : i32 to vector<8x128xi32>
    %28 = arith.addi %2, %27 : vector<8x128xi32>
    %c0_i32_7 = arith.constant 0 : i32
    %29 = vector.broadcast %c0_i32_7 : i32 to vector<8x128xi32>
    %30 = arith.cmpi sge, %28, %29 : vector<8x128xi32>
    %c8_i32_8 = arith.constant 8 : i32
    %31 = vector.broadcast %c8_i32_8 : i32 to vector<8x128xi32>
    %32 = arith.cmpi slt, %28, %31 : vector<8x128xi32>
    %33 = arith.andi %30, %32 : vector<8x128xi1>
    %cst_9 = arith.constant 0.000000e+00 : f32
    %34 = vector.broadcast %cst_9 : f32 to vector<8x128xf32>
    %35 = arith.select %33, %26, %34 : vector<8x128xi1>, vector<8x128xf32>
    %c2 = arith.constant 2 : index
    %c0_10 = arith.constant 0 : index
    %36 = vector.load %arg3[%c2, %c0_10] : memref<3x128xf32, #tpu.memory_space<vmem>>, vector<1x128xf32>
    %37 = vector.shape_cast %36 : vector<1x128xf32> to vector<128xf32>
    %38 = vector.shape_cast %37 : vector<128xf32> to vector<1x128xf32>
    %39 = vector.broadcast %38 : vector<1x128xf32> to vector<8x128xf32>
    %40 = arith.mulf %35, %39 : vector<8x128xf32>
    %41 = arith.addf %25, %40 : vector<8x128xf32>
    %c0_11 = arith.constant 0 : index
    %c0_12 = arith.constant 0 : index
    %42 = vector.load %arg4[%c0_11, %c0_12] : memref<1x128xf32, #tpu.memory_space<vmem>>, vector<1x128xf32>
    %43 = vector.shape_cast %42 : vector<1x128xf32> to vector<128xf32>
    %44 = vector.shape_cast %43 : vector<128xf32> to vector<1x128xf32>
    %45 = vector.broadcast %44 : vector<1x128xf32> to vector<8x128xf32>
    %46 = arith.addf %41, %45 : vector<8x128xf32>
    %47 = arith.addf %46, %1 : vector<8x128xf32>
    %c0_13 = arith.constant 0 : index
    %c0_14 = arith.constant 0 : index
    %c0_15 = arith.constant 0 : index
    %48 = vector.load %arg5[%c0_13, %c0_14, %c0_15] : memref<1x8x128xf32, #tpu.memory_space<vmem>>, vector<1x8x128xf32>
    %49 = vector.shape_cast %48 : vector<1x8x128xf32> to vector<8x128xf32>
    %50 = vector.shape_cast %47 : vector<8x128xf32> to vector<1x8x128xf32>
    tpu.vector_store %arg5[%c0_13, %c0_14, %c0_15], %50 {strides = array<i32>} : memref<1x8x128xf32, #tpu.memory_space<vmem>>, vector<1x8x128xf32>,
    return
  }
  func.func @transform_0(%arg0: i32, %arg1: i32) -> (i32, i32, i32) {
    %c0_i32 = arith.constant 0 : i32
    %c0_i32_0 = arith.constant 0 : i32
    return %arg0, %c0_i32, %arg1 : i32, i32, i32
  }
  func.func @transform_1(%arg0: i32, %arg1: i32) -> (i32, i32) {
    %c0_i32 = arith.constant 0 : i32
    %c0_i32_0 = arith.constant 0 : i32
    return %c0_i32, %arg1 : i32, i32
  }
  func.func @transform_2(%arg0: i32, %arg1: i32) -> (i32, i32) {
    %c0_i32 = arith.constant 0 : i32
    %c0_i32_0 = arith.constant 0 : i32
    return %c0_i32, %arg1 : i32, i32
  }
  func.func @transform_3(%arg0: i32, %arg1: i32) -> (i32, i32, i32) {
    %c0_i32 = arith.constant 0 : i32
    %c0_i32_0 = arith.constant 0 : i32
    return %arg0, %c0_i32, %arg1 : i32, i32, i32
  }
}

</mosaic_0001>

<llo_original>
// kernel: conv_pos_enc_forward.3
$region0: #{conv_pos_enc_forward.3}
  #allocation0 [shape = 'u32[]', space=smem, size = 0x4, offset = 0x4, fixed_abs, tag = 'smem constant byte address 0x4 - core index']
  #allocation1 [shape = 'u32[72,128]{1,0:T(1,128)}', space=vmem, size = 0x9000, scoped, tag = 'internal scratch']
  %s0 = inlined_call_operand.vmem [shape: f32[2,16,128], index: 0, kind: input, shape index: {}]
  %s1 = inlined_call_operand.vmem [shape: f32[3,128], index: 1, kind: input, shape index: {}]
  %s2 = inlined_call_operand.vmem [shape: f32[1,128], index: 2, kind: input, shape index: {}]
  %s3 = inlined_call_operand.hbm [shape: f32[2,16,128], index: 3, kind: output, shape index: {}]
  %s4 = sld [smem:[#allocation0]]
  $region45: #{conv_pos_enc_forward.3} parent=0
    _
  %s6 = ssub.s32 1, %s4
  %s7 = scalar_select 0, %s6, %s4
  $region1: #{conv_pos_enc_forward.3} parent=0
    #allocation2 [shape = 'u8[16384]{0}', space=vmem, size = 0x4000, scoped, tag = 'output window, operand 0']
    #allocation3 [shape = 's32[2]{0}', space=sflag, size = 0x8, scoped, tag = 'scoped memory for conv_pos_enc_forward.3']
    %8 = vsyncpa [#allocation3], 0
    %s9 = scalar_lea.sflag [#allocation3], 1
    %10 = vsyncpa %s9, 0
    loop: start=0, step=1, limit=4
    $region2: #{conv_pos_enc_forward.3} parent=1 // loop_pre_header
      _
    $region3: #{conv_pos_enc_forward.3} parent=1 // loop_header
      %s12 = sphi 0, %s16
      %p13 = scmp.ge.s32.totalorder %s12, 4
      %s19 = sphi 0, %s31
      %s20 = sphi 0, %s27
      %s21 = sphi 0, %s19
      %s22 = sphi 0, %s20
      %s23 = sphi 0, %s21
      %s24 = sphi 0, %s22
      %s36 = sphi 0, %s38
      %s39 = sphi 0, %s36
      %s40 = sphi 0, %s39
      %s56 = sphi 0, %s40
      %s62 = sphi 0, %s64
      %s65 = sphi 0, %s62
      %s66 = sphi 0, %s65
      %s82 = sphi 0, %s66
      %s88 = sphi 0, %s90
      %s91 = sphi 0, %s88
      %s92 = sphi 0, %s91
      %s108 = sphi 0, %s92
      %s116 = sphi 0, %s118
      %s119 = sphi 0, %s116
      %s120 = sphi 0, %s119
      %s136 = sphi 0, %s120
    $region4: #{conv_pos_enc_forward.3} parent=1 // loop_header_branch
      %15 = sbr.rel (%p13) target = $region8
    $region5: #{conv_pos_enc_forward.3} parent=1 // loop_body
      %s17 = ssub.s32 %s12, 1
      %s18 = ssub.s32 %s12, 2
      %s25 = sadd.s32 1, %s20
      %p26 = scmp.ge.s32.totalorder %s25, 1
      %s27 = scalar_select %p26, 0, %s25
      %s28 = sadd.s32 1, %s19
      %s29 = scalar_select %p26, %s28, %s19
      %p30 = scmp.ge.s32.totalorder %s29, 2
      %s31 = scalar_select %p30, 0, %s29
      %s32 = ssub.s32 %s19, %s31
      %s33 = ssub.s32 %s20, %s27
      %s34 = sor.u32 %s32, %s33
      %p35 = scmp.eq.s32.totalorder %s34, 0
      %s37 = sadd.s32 %s36, 1
      %s38 = scalar_select %p35, %s36, %s37
      %p41 = pneg %p35
      %p42 = scmp.eq.s32.totalorder %s12, 1
      %p43 = por %p41, %p42
      %p44 = scmp.ne.s32.totalorder %s36, %s39
      %p45 = scmp.eq.s32.totalorder %s12, 0
      %p46 = por %p44, %p45
      %p47 = scmp.ne.s32.totalorder %s36, %s39
      %p48 = scmp.eq.s32.totalorder %s17, 1
      %p49 = por %p47, %p48
      %p50 = scmp.ne.s32.totalorder %s39, %s40
      %p51 = scmp.eq.s32.totalorder %s17, 0
      %p52 = por %p50, %p51
      %p53 = scmp.ne.s32.totalorder %s39, %s40
      %p54 = scmp.eq.s32.totalorder %s18, 1
      %p55 = por %p53, %p54
      %p57 = scmp.ne.s32.totalorder %s40, %s56
      %p58 = scmp.eq.s32.totalorder %s18, 0
      %p59 = por %p57, %p58
      %s60 = ssub.s32 %s20, %s27
      %p61 = scmp.eq.s32.totalorder %s60, 0
      %s63 = sadd.s32 %s62, 1
      %s64 = scalar_select %p61, %s62, %s63
      %p67 = pneg %p61
      %p68 = scmp.eq.s32.totalorder %s12, 1
      %p69 = por %p67, %p68
      %p70 = scmp.ne.s32.totalorder %s62, %s65
      %p71 = scmp.eq.s32.totalorder %s12, 0
      %p72 = por %p70, %p71
      %p73 = scmp.ne.s32.totalorder %s62, %s65
      %p74 = scmp.eq.s32.totalorder %s17, 1
      %p75 = por %p73, %p74
      %p76 = scmp.ne.s32.totalorder %s65, %s66
      %p77 = scmp.eq.s32.totalorder %s17, 0
      %p78 = por %p76, %p77
      %p79 = scmp.ne.s32.totalorder %s65, %s66
      %p80 = scmp.eq.s32.totalorder %s18, 1
      %p81 = por %p79, %p80
      %p83 = scmp.ne.s32.totalorder %s66, %s82
      %p84 = scmp.eq.s32.totalorder %s18, 0
      %p85 = por %p83, %p84
      %s86 = ssub.s32 %s20, %s27
      %p87 = scmp.eq.s32.totalorder %s86, 0
      %s89 = sadd.s32 %s88, 1
      %s90 = scalar_select %p87, %s88, %s89
      %p93 = pneg %p87
      %p94 = scmp.eq.s32.totalorder %s12, 1
      %p95 = por %p93, %p94
      %p96 = scmp.ne.s32.totalorder %s88, %s91
      %p97 = scmp.eq.s32.totalorder %s12, 0
      %p98 = por %p96, %p97
      %p99 = scmp.ne.s32.totalorder %s88, %s91
      %p100 = scmp.eq.s32.totalorder %s17, 1
      %p101 = por %p99, %p100
      %p102 = scmp.ne.s32.totalorder %s91, %s92
      %p103 = scmp.eq.s32.totalorder %s17, 0
      %p104 = por %p102, %p103
      %p105 = scmp.ne.s32.totalorder %s91, %s92
      %p106 = scmp.eq.s32.totalorder %s18, 1
      %p107 = por %p105, %p106
      %p109 = scmp.ne.s32.totalorder %s92, %s108
      %p110 = scmp.eq.s32.totalorder %s18, 0
      %p111 = por %p109, %p110
      %s112 = ssub.s32 %s19, %s31
      %s113 = ssub.s32 %s20, %s27
      %s114 = sor.u32 %s112, %s113
      %p115 = scmp.eq.s32.totalorder %s114, 0
      %s117 = sadd.s32 %s116, 1
      %s118 = scalar_select %p115, %s116, %s117
      %p121 = pneg %p115
      %p122 = scmp.eq.s32.totalorder %s12, 1
      %p123 = por %p121, %p122
      %p124 = scmp.ne.s32.totalorder %s116, %s119
      %p125 = scmp.eq.s32.totalorder %s12, 0
      %p126 = por %p124, %p125
      %p127 = scmp.ne.s32.totalorder %s116, %s119
      %p128 = scmp.eq.s32.totalorder %s17, 1
      %p129 = por %p127, %p128
      %p130 = scmp.ne.s32.totalorder %s119, %s120
      %p131 = scmp.eq.s32.totalorder %s17, 0
      %p132 = por %p130, %p131
      %p133 = scmp.ne.s32.totalorder %s119, %s120
      %p134 = scmp.eq.s32.totalorder %s18, 1
      %p135 = por %p133, %p134
      %p137 = scmp.ne.s32.totalorder %s120, %s136
      %p138 = scmp.eq.s32.totalorder %s18, 0
      %p139 = por %p137, %p138
      %p140 = scmp.le.s32.totalorder 1, %s12
      %p141 = scmp.lt.s32.totalorder %s12, 3
      %p142 = pnand %p140, %p141
      %p143 = pneg %p142
      // Predicated region
      $region9: #{conv_pos_enc_forward.3} parent=5 // pred_check
        _
      $region10: #{conv_pos_enc_forward.3} parent=5 // pred_check_branch
        %145 = sbr.rel (%p142) target = $region12
      $region11: #{conv_pos_enc_forward.3} parent=5 // pred_region
        %s146 = ssub.s32 %s12, 1
        // Predicated region
        $region13: #{conv_pos_enc_forward.3} parent=11 // pred_check
          %p147 = pneg %p78
        $region14: #{conv_pos_enc_forward.3} parent=11 // pred_check_branch
          %149 = sbr.rel (%p147) target = $region16
        $region15: #{conv_pos_enc_forward.3} parent=11 // pred_region
          %p150 = scmp.lt.s32.totalorder %s22, 0
          %s151 = scalar_select %p150, %s22, 0
          %s152 = smul.addr %s151, 4
          %s153 = scalar_lea.vmem %s1, %s152
        $region16: #{conv_pos_enc_forward.3} parent=11 // pred_fallthru
          _
        // Predicated region
        $region17: #{conv_pos_enc_forward.3} parent=11 // pred_check
          %p154 = pneg %p104
        $region18: #{conv_pos_enc_forward.3} parent=11 // pred_check_branch
          %156 = sbr.rel (%p154) target = $region20
        $region19: #{conv_pos_enc_forward.3} parent=11 // pred_region
          %p157 = scmp.lt.s32.totalorder %s22, 0
          %s158 = scalar_select %p157, %s22, 0
          %s159 = scalar_lea.vmem %s2, %s158
        $region20: #{conv_pos_enc_forward.3} parent=11 // pred_fallthru
          _
      $region12: #{conv_pos_enc_forward.3} parent=5 // pred_fallthru
        _
      %p160 = scmp.lt.s32.totalorder %s12, 2
      // Predicated region
      $region21: #{conv_pos_enc_forward.3} parent=5 // pred_check
        %p161 = pneg %p160
      $region22: #{conv_pos_enc_forward.3} parent=5 // pred_check_branch
        %163 = sbr.rel (%p161) target = $region24
      $region23: #{conv_pos_enc_forward.3} parent=5 // pred_region
        // Predicated region
        $region25: #{conv_pos_enc_forward.3} parent=23 // pred_check
          %p164 = pneg %p46
        $region26: #{conv_pos_enc_forward.3} parent=23 // pred_check_branch
          %166 = sbr.rel (%p164) target = $region28
        $region27: #{conv_pos_enc_forward.3} parent=23 // pred_region
          %p167 = scmp.lt.s32.totalorder %s19, 1
          %s168 = scalar_select %p167, %s19, 1
          %p169 = scmp.lt.s32.totalorder %s20, 0
          %s170 = scalar_select %p169, %s20, 0
          %s171 = smul.addr %s168, 2
          %s172 = sadd.s32 %s170, %s171
          %s173 = smul.addr %s172, 8
          %s174 = scalar_lea.vmem %s0, %s173
        $region28: #{conv_pos_enc_forward.3} parent=23 // pred_fallthru
          _
      $region24: #{conv_pos_enc_forward.3} parent=5 // pred_fallthru
        _
      %p175 = scmp.le.s32.totalorder 1, %s12
      %p176 = scmp.lt.s32.totalorder %s12, 3
      %p177 = pnand %p175, %p176
      %p178 = pneg %p177
      // Predicated region
      $region29: #{conv_pos_enc_forward.3} parent=5 // pred_check
        _
      $region30: #{conv_pos_enc_forward.3} parent=5 // pred_check_branch
        %180 = sbr.rel (%p177) target = $region32
      $region31: #{conv_pos_enc_forward.3} parent=5 // pred_region
        %s181 = ssub.s32 %s12, 1
        %p182 = scmp.lt.s32.totalorder %s21, 1
        %s183 = scalar_select %p182, %s21, 1
        %p184 = scmp.lt.s32.totalorder %s22, 0
        %s185 = scalar_select %p184, %s22, 0
        %s186 = smul.addr %s183, 2
        %s187 = sadd.s32 %s185, %s186
        %s188 = smul.addr %s187, 8
        %s189 = scalar_lea.vmem %s0, %s188
        %p190 = pneg %p52
        %p191 = pneg %p49
        %p192 = scmp.lt.s32.totalorder %s22, 0
        %s193 = scalar_select %p192, %s22, 0
        %s194 = smul.addr %s193, 4
        %s195 = scalar_lea.vmem %s1, %s194
        %p196 = pneg %p78
        %p197 = pneg %p75
        %p198 = scmp.lt.s32.totalorder %s22, 0
        %s199 = scalar_select %p198, %s22, 0
        %s200 = scalar_lea.vmem %s2, %s199
        %p201 = pneg %p104
        %p202 = pneg %p101
        %p203 = pneg %p132
        %p204 = pneg %p129
        %s205 = sand.u32 %s119, 1
        %s206 = scalar_lea.sflag [#allocation3], %s205
        %s207 = sand.u32 %s119, 1
        %s208 = smul.addr %s207, 16
        %s209 = scalar_lea.vmem [#allocation2], %s208
        %p210 = scmp.lt.s32.totalorder %s21, 1
        %s211 = scalar_select %p210, %s21, 1
        %p212 = scmp.lt.s32.totalorder %s22, 0
        %s213 = scalar_select %p212, %s22, 0
        %s214 = smul.addr %s211, 2
        %s215 = sadd.s32 %s213, %s214
        %s216 = smul.addr %s215, 8
        %s217 = scalar_lea.vmem %s0, %s216
        %p218 = scmp.lt.s32.totalorder %s22, 0
        %s219 = scalar_select %p218, %s22, 0
        %s220 = smul.addr %s219, 4
        %s221 = scalar_lea.vmem %s1, %s220
        %p222 = scmp.lt.s32.totalorder %s22, 0
        %s223 = scalar_select %p222, %s22, 0
        %s224 = scalar_lea.vmem %s2, %s223
        %v225 = vld [vmem:[%s217] sm:$0xff]
        %v226 = vld [vmem:[%s217 + $0x8] sm:$0xff]
        %v227 = vlaneseq
        %v228 = vshrl.u32 %v227, 7
        %v229 = vadd.s32 %v228, 8
        %v230 = vrot.slane %v225, 7
        %v231 = vrot.slane %v226, 7
        %vm232 = vcmp.lt.s32.totalorder %v228, 1
        %v233 = vsel %vm232, %v230, %v231
        %v234 = vsel %vm232, %v231, %v230
        %v235 = vadd.s32 %v228, 4294967295
        %v236 = vadd.s32 %v229, 4294967295
        %vm237 = vcmp.ge.s32.totalorder %v235, 0
        %vm238 = vcmp.ge.s32.totalorder %v236, 0
        %vm239 = vcmp.lt.s32.totalorder %v235, 16
        %vm240 = vcmp.lt.s32.totalorder %v236, 16
        %vm241 = vmand %vm237, %vm239
        %vm242 = vmand %vm238, %vm240
        %v243 = vsel %vm241, %v234, 0.0
        %v244 = vsel %vm242, %v233, 0.0
        %v245 = vld [vmem:[%s221] sm:$0x1]
        %v246 = vperm.slane %v245, 0
        %v247 = vmul.f32 %v243, %v246
        %v248 = vmul.f32 %v244, %v246
        %v249 = vadd.f32 %v247, 0.0
        %v250 = vadd.f32 %v248, 0.0
        %v251 = vld [vmem:[%s221 + $0x1] sm:$0x1]
        %v252 = vperm.slane %v251, 0
        %v253 = vmul.f32 %v225, %v252
        %v254 = vmul.f32 %v226, %v252
        %v255 = vadd.f32 %v249, %v253
        %v256 = vadd.f32 %v250, %v254
        %v257 = vrot.slane %v225, 1
        %v258 = vrot.slane %v226, 1
        %vm259 = vcmp.lt.s32.totalorder %v228, 7
        %v260 = vsel %vm259, %v257, %v258
        %v261 = vsel %vm259, %v258, %v257
        %v262 = vadd.s32 %v228, 1
        %v263 = vadd.s32 %v229, 1
        %vm264 = vcmp.ge.s32.totalorder %v262, 0
        %vm265 = vcmp.ge.s32.totalorder %v263, 0
        %vm266 = vcmp.lt.s32.totalorder %v262, 16
        %vm267 = vcmp.lt.s32.totalorder %v263, 16
        %vm268 = vmand %vm264, %vm266
        %vm269 = vmand %vm265, %vm267
        %v270 = vsel %vm268, %v260, 0.0
        %v271 = vsel %vm269, %v261, 0.0
        %v272 = vld [vmem:[%s221 + $0x2] sm:$0x1]
        %v273 = vperm.slane %v272, 0
        %v274 = vmul.f32 %v270, %v273
        %v275 = vmul.f32 %v271, %v273
        %v276 = vadd.f32 %v255, %v274
        %v277 = vadd.f32 %v256, %v275
        %v278 = vld [vmem:[%s224] sm:$0x1]
        %v280 = vperm.slane %v278, 0
        %v282 = vadd.f32 %v276, %v280
        %v283 = vadd.f32 %v277, %v280
        %v284 = vadd.f32 %v282, %v225
        %v285 = vadd.f32 %v283, %v226
        %286 = vst [vmem:[%s209] sm:$0xff] %v284
        %287 = vst [vmem:[%s209 + $0x8] sm:$0xff] %v285
        %s288 = sand.u32 %s119, 1
        %s289 = scalar_lea.sflag [#allocation3], %s288
        %s290 = sand.u32 %s119, 1
        %s291 = smul.addr %s290, 16
        %s292 = scalar_lea.vmem [#allocation2], %s291
        // Predicated region
        $region33: #{conv_pos_enc_forward.3} parent=31 // pred_check
          %p293 = pneg %p129
        $region34: #{conv_pos_enc_forward.3} parent=31 // pred_check_branch
          %295 = sbr.rel (%p293) target = $region36
        $region35: #{conv_pos_enc_forward.3} parent=31 // pred_region
          %297 = vsyncadd %s289, 0
          %s298 = smul.addr %s21, 2
          %s299 = sadd.s32 %s22, %s298
          %s300 = smul.addr %s299, 8
          %s301 = scalar_lea.hbm %s3, %s300
          %s302 = sshll.u32 %s292, 4
          %s303 = int_to_ptr.vmem [resolvable:$true] %s302
          %s304 = sshll.u32 %s301, 4
          %s305 = int_to_ptr.hbm [resolvable:$true] %s304
          %310 = dma.vmem_to_hbm [thread:$0]  %s303, 256, %s305, %s289, 128, 128, 8
        $region36: #{conv_pos_enc_forward.3} parent=31 // pred_fallthru
          _
      $region32: #{conv_pos_enc_forward.3} parent=5 // pred_fallthru
        _
      %p311 = scmp.le.s32.totalorder 2, %s12
      // Predicated region
      $region37: #{conv_pos_enc_forward.3} parent=5 // pred_check
        %p312 = pneg %p311
      $region38: #{conv_pos_enc_forward.3} parent=5 // pred_check_branch
        %314 = sbr.rel (%p312) target = $region40
      $region39: #{conv_pos_enc_forward.3} parent=5 // pred_region
        %s315 = ssub.s32 %s12, 2
        // Predicated region
        $region41: #{conv_pos_enc_forward.3} parent=39 // pred_check
          %p316 = pneg %p135
        $region42: #{conv_pos_enc_forward.3} parent=39 // pred_check_branch
          %318 = sbr.rel (%p316) target = $region44
        $region43: #{conv_pos_enc_forward.3} parent=39 // pred_region
          %s319 = sand.u32 %s120, 1
          %s320 = scalar_lea.sflag [#allocation3], %s319
          %s321 = sand.u32 %s120, 1
          %s322 = smul.addr %s321, 16
          %s323 = scalar_lea.vmem [#allocation2], %s322
          %325 = dma.done %s320, 256
        $region44: #{conv_pos_enc_forward.3} parent=39 // pred_fallthru
          _
      $region40: #{conv_pos_enc_forward.3} parent=5 // pred_fallthru
        _
    $region6: #{conv_pos_enc_forward.3} parent=1 // loop_footer
      %s16 = sadd.s32 1, %s12
    $region7: #{conv_pos_enc_forward.3} parent=1 // loop_footer_branch
      %11 = sbr.rel target = $region3
    $region8: #{conv_pos_enc_forward.3} parent=1 // loop_exit
      _
    %326 = vsyncpa [#allocation3], 1
    %s327 = scalar_lea.sflag [#allocation3], 1
    %328 = vsyncpa %s327, 1

// kernel: conv_pos_enc_forward.2
$region0: #{conv_pos_enc_forward.2}
  #allocation0 [shape = 'u32[]', space=smem, size = 0x4, offset = 0x4, fixed_abs, tag = 'smem constant byte address 0x4 - core index']
  #allocation1 [shape = 'u32[72,128]{1,0:T(1,128)}', space=vmem, size = 0x9000, scoped, tag = 'internal scratch']
  %s0 = inlined_call_operand.vmem [shape: f32[2,8,128], index: 0, kind: input, shape index: {}]
  %s1 = inlined_call_operand.vmem [shape: f32[3,128], index: 1, kind: input, shape index: {}]
  %s2 = inlined_call_operand.vmem [shape: f32[1,128], index: 2, kind: input, shape index: {}]
  %s3 = inlined_call_operand.hbm [shape: f32[2,8,128], index: 3, kind: output, shape index: {}]
  %s4 = sld [smem:[#allocation0]]
  $region45: #{conv_pos_enc_forward.2} parent=0
    _
  %s6 = ssub.s32 1, %s4
  %s7 = scalar_select 0, %s6, %s4
  $region1: #{conv_pos_enc_forward.2} parent=0
    #allocation2 [shape = 'u8[8192]{0}', space=vmem, size = 0x2000, scoped, tag = 'output window, operand 0']
    #allocation3 [shape = 's32[2]{0}', space=sflag, size = 0x8, scoped, tag = 'scoped memory for conv_pos_enc_forward.2']
    %8 = vsyncpa [#allocation3], 0
    %s9 = scalar_lea.sflag [#allocation3], 1
    %10 = vsyncpa %s9, 0
    loop: start=0, step=1, limit=4
    $region2: #{conv_pos_enc_forward.2} parent=1 // loop_pre_header
      _
    $region3: #{conv_pos_enc_forward.2} parent=1 // loop_header
      %s12 = sphi 0, %s16
      %p13 = scmp.ge.s32.totalorder %s12, 4
      %s19 = sphi 0, %s31
      %s20 = sphi 0, %s27
      %s21 = sphi 0, %s19
      %s22 = sphi 0, %s20
      %s23 = sphi 0, %s21
      %s24 = sphi 0, %s22
      %s36 = sphi 0, %s38
      %s39 = sphi 0, %s36
      %s40 = sphi 0, %s39
      %s56 = sphi 0, %s40
      %s62 = sphi 0, %s64
      %s65 = sphi 0, %s62
      %s66 = sphi 0, %s65
      %s82 = sphi 0, %s66
      %s88 = sphi 0, %s90
      %s91 = sphi 0, %s88
      %s92 = sphi 0, %s91
      %s108 = sphi 0, %s92
      %s116 = sphi 0, %s118
      %s119 = sphi 0, %s116
      %s120 = sphi 0, %s119
      %s136 = sphi 0, %s120
    $region4: #{conv_pos_enc_forward.2} parent=1 // loop_header_branch
      %15 = sbr.rel (%p13) target = $region8
    $region5: #{conv_pos_enc_forward.2} parent=1 // loop_body
      %s17 = ssub.s32 %s12, 1
      %s18 = ssub.s32 %s12, 2
      %s25 = sadd.s32 1, %s20
      %p26 = scmp.ge.s32.totalorder %s25, 1
      %s27 = scalar_select %p26, 0, %s25
      %s28 = sadd.s32 1, %s19
      %s29 = scalar_select %p26, %s28, %s19
      %p30 = scmp.ge.s32.totalorder %s29, 2
      %s31 = scalar_select %p30, 0, %s29
      %s32 = ssub.s32 %s19, %s31
      %s33 = ssub.s32 %s20, %s27
      %s34 = sor.u32 %s32, %s33
      %p35 = scmp.eq.s32.totalorder %s34, 0
      %s37 = sadd.s32 %s36, 1
      %s38 = scalar_select %p35, %s36, %s37
      %p41 = pneg %p35
      %p42 = scmp.eq.s32.totalorder %s12, 1
      %p43 = por %p41, %p42
      %p44 = scmp.ne.s32.totalorder %s36, %s39
      %p45 = scmp.eq.s32.totalorder %s12, 0
      %p46 = por %p44, %p45
      %p47 = scmp.ne.s32.totalorder %s36, %s39
      %p48 = scmp.eq.s32.totalorder %s17, 1
      %p49 = por %p47, %p48
      %p50 = scmp.ne.s32.totalorder %s39, %s40
      %p51 = scmp.eq.s32.totalorder %s17, 0
      %p52 = por %p50, %p51
      %p53 = scmp.ne.s32.totalorder %s39, %s40
      %p54 = scmp.eq.s32.totalorder %s18, 1
      %p55 = por %p53, %p54
      %p57 = scmp.ne.s32.totalorder %s40, %s56
      %p58 = scmp.eq.s32.totalorder %s18, 0
      %p59 = por %p57, %p58
      %s60 = ssub.s32 %s20, %s27
      %p61 = scmp.eq.s32.totalorder %s60, 0
      %s63 = sadd.s32 %s62, 1
      %s64 = scalar_select %p61, %s62, %s63
      %p67 = pneg %p61
      %p68 = scmp.eq.s32.totalorder %s12, 1
      %p69 = por %p67, %p68
      %p70 = scmp.ne.s32.totalorder %s62, %s65
      %p71 = scmp.eq.s32.totalorder %s12, 0
      %p72 = por %p70, %p71
      %p73 = scmp.ne.s32.totalorder %s62, %s65
      %p74 = scmp.eq.s32.totalorder %s17, 1
      %p75 = por %p73, %p74
      %p76 = scmp.ne.s32.totalorder %s65, %s66
      %p77 = scmp.eq.s32.totalorder %s17, 0
      %p78 = por %p76, %p77
      %p79 = scmp.ne.s32.totalorder %s65, %s66
      %p80 = scmp.eq.s32.totalorder %s18, 1
      %p81 = por %p79, %p80
      %p83 = scmp.ne.s32.totalorder %s66, %s82
      %p84 = scmp.eq.s32.totalorder %s18, 0
      %p85 = por %p83, %p84
      %s86 = ssub.s32 %s20, %s27
      %p87 = scmp.eq.s32.totalorder %s86, 0
      %s89 = sadd.s32 %s88, 1
      %s90 = scalar_select %p87, %s88, %s89
      %p93 = pneg %p87
      %p94 = scmp.eq.s32.totalorder %s12, 1
      %p95 = por %p93, %p94
      %p96 = scmp.ne.s32.totalorder %s88, %s91
      %p97 = scmp.eq.s32.totalorder %s12, 0
      %p98 = por %p96, %p97
      %p99 = scmp.ne.s32.totalorder %s88, %s91
      %p100 = scmp.eq.s32.totalorder %s17, 1
      %p101 = por %p99, %p100
      %p102 = scmp.ne.s32.totalorder %s91, %s92
      %p103 = scmp.eq.s32.totalorder %s17, 0
      %p104 = por %p102, %p103
      %p105 = scmp.ne.s32.totalorder %s91, %s92
      %p106 = scmp.eq.s32.totalorder %s18, 1
      %p107 = por %p105, %p106
      %p109 = scmp.ne.s32.totalorder %s92, %s108
      %p110 = scmp.eq.s32.totalorder %s18, 0
      %p111 = por %p109, %p110
      %s112 = ssub.s32 %s19, %s31
      %s113 = ssub.s32 %s20, %s27
      %s114 = sor.u32 %s112, %s113
      %p115 = scmp.eq.s32.totalorder %s114, 0
      %s117 = sadd.s32 %s116, 1
      %s118 = scalar_select %p115, %s116, %s117
      %p121 = pneg %p115
      %p122 = scmp.eq.s32.totalorder %s12, 1
      %p123 = por %p121, %p122
      %p124 = scmp.ne.s32.totalorder %s116, %s119
      %p125 = scmp.eq.s32.totalorder %s12, 0
      %p126 = por %p124, %p125
      %p127 = scmp.ne.s32.totalorder %s116, %s119
      %p128 = scmp.eq.s32.totalorder %s17, 1
      %p129 = por %p127, %p128
      %p130 = scmp.ne.s32.totalorder %s119, %s120
      %p131 = scmp.eq.s32.totalorder %s17, 0
      %p132 = por %p130, %p131
      %p133 = scmp.ne.s32.totalorder %s119, %s120
      %p134 = scmp.eq.s32.totalorder %s18, 1
      %p135 = por %p133, %p134
      %p137 = scmp.ne.s32.totalorder %s120, %s136
      %p138 = scmp.eq.s32.totalorder %s18, 0
      %p139 = por %p137, %p138
      %p140 = scmp.le.s32.totalorder 1, %s12
      %p141 = scmp.lt.s32.totalorder %s12, 3
      %p142 = pnand %p140, %p141
      %p143 = pneg %p142
      // Predicated region
      $region9: #{conv_pos_enc_forward.2} parent=5 // pred_check
        _
      $region10: #{conv_pos_enc_forward.2} parent=5 // pred_check_branch
        %145 = sbr.rel (%p142) target = $region12
      $region11: #{conv_pos_enc_forward.2} parent=5 // pred_region
        %s146 = ssub.s32 %s12, 1
        // Predicated region
        $region13: #{conv_pos_enc_forward.2} parent=11 // pred_check
          %p147 = pneg %p78
        $region14: #{conv_pos_enc_forward.2} parent=11 // pred_check_branch
          %149 = sbr.rel (%p147) target = $region16
        $region15: #{conv_pos_enc_forward.2} parent=11 // pred_region
          %p150 = scmp.lt.s32.totalorder %s22, 0
          %s151 = scalar_select %p150, %s22, 0
          %s152 = smul.addr %s151, 4
          %s153 = scalar_lea.vmem %s1, %s152
        $region16: #{conv_pos_enc_forward.2} parent=11 // pred_fallthru
          _
        // Predicated region
        $region17: #{conv_pos_enc_forward.2} parent=11 // pred_check
          %p154 = pneg %p104
        $region18: #{conv_pos_enc_forward.2} parent=11 // pred_check_branch
          %156 = sbr.rel (%p154) target = $region20
        $region19: #{conv_pos_enc_forward.2} parent=11 // pred_region
          %p157 = scmp.lt.s32.totalorder %s22, 0
          %s158 = scalar_select %p157, %s22, 0
          %s159 = scalar_lea.vmem %s2, %s158
        $region20: #{conv_pos_enc_forward.2} parent=11 // pred_fallthru
          _
      $region12: #{conv_pos_enc_forward.2} parent=5 // pred_fallthru
        _
      %p160 = scmp.lt.s32.totalorder %s12, 2
      // Predicated region
      $region21: #{conv_pos_enc_forward.2} parent=5 // pred_check
        %p161 = pneg %p160
      $region22: #{conv_pos_enc_forward.2} parent=5 // pred_check_branch
        %163 = sbr.rel (%p161) target = $region24
      $region23: #{conv_pos_enc_forward.2} parent=5 // pred_region
        // Predicated region
        $region25: #{conv_pos_enc_forward.2} parent=23 // pred_check
          %p164 = pneg %p46
        $region26: #{conv_pos_enc_forward.2} parent=23 // pred_check_branch
          %166 = sbr.rel (%p164) target = $region28
        $region27: #{conv_pos_enc_forward.2} parent=23 // pred_region
          %p167 = scmp.lt.s32.totalorder %s19, 1
          %s168 = scalar_select %p167, %s19, 1
          %p169 = scmp.lt.s32.totalorder %s20, 0
          %s170 = scalar_select %p169, %s20, 0
          %s171 = sadd.s32 %s170, %s168
          %s172 = smul.addr %s171, 8
          %s173 = scalar_lea.vmem %s0, %s172
        $region28: #{conv_pos_enc_forward.2} parent=23 // pred_fallthru
          _
      $region24: #{conv_pos_enc_forward.2} parent=5 // pred_fallthru
        _
      %p174 = scmp.le.s32.totalorder 1, %s12
      %p175 = scmp.lt.s32.totalorder %s12, 3
      %p176 = pnand %p174, %p175
      %p177 = pneg %p176
      // Predicated region
      $region29: #{conv_pos_enc_forward.2} parent=5 // pred_check
        _
      $region30: #{conv_pos_enc_forward.2} parent=5 // pred_check_branch
        %179 = sbr.rel (%p176) target = $region32
      $region31: #{conv_pos_enc_forward.2} parent=5 // pred_region
        %s180 = ssub.s32 %s12, 1
        %p181 = scmp.lt.s32.totalorder %s21, 1
        %s182 = scalar_select %p181, %s21, 1
        %p183 = scmp.lt.s32.totalorder %s22, 0
        %s184 = scalar_select %p183, %s22, 0
        %s185 = sadd.s32 %s184, %s182
        %s186 = smul.addr %s185, 8
        %s187 = scalar_lea.vmem %s0, %s186
        %p188 = pneg %p52
        %p189 = pneg %p49
        %p190 = scmp.lt.s32.totalorder %s22, 0
        %s191 = scalar_select %p190, %s22, 0
        %s192 = smul.addr %s191, 4
        %s193 = scalar_lea.vmem %s1, %s192
        %p194 = pneg %p78
        %p195 = pneg %p75
        %p196 = scmp.lt.s32.totalorder %s22, 0
        %s197 = scalar_select %p196, %s22, 0
        %s198 = scalar_lea.vmem %s2, %s197
        %p199 = pneg %p104
        %p200 = pneg %p101
        %p201 = pneg %p132
        %p202 = pneg %p129
        %s203 = sand.u32 %s119, 1
        %s204 = scalar_lea.sflag [#allocation3], %s203
        %s205 = sand.u32 %s119, 1
        %s206 = smul.addr %s205, 8
        %s207 = scalar_lea.vmem [#allocation2], %s206
        %p208 = scmp.lt.s32.totalorder %s21, 1
        %s209 = scalar_select %p208, %s21, 1
        %p210 = scmp.lt.s32.totalorder %s22, 0
        %s211 = scalar_select %p210, %s22, 0
        %s212 = sadd.s32 %s211, %s209
        %s213 = smul.addr %s212, 8
        %s214 = scalar_lea.vmem %s0, %s213
        %p215 = scmp.lt.s32.totalorder %s22, 0
        %s216 = scalar_select %p215, %s22, 0
        %s217 = smul.addr %s216, 4
        %s218 = scalar_lea.vmem %s1, %s217
        %p219 = scmp.lt.s32.totalorder %s22, 0
        %s220 = scalar_select %p219, %s22, 0
        %s221 = scalar_lea.vmem %s2, %s220
        %v222 = vld [vmem:[%s214] sm:$0xff]
        %v223 = vlaneseq
        %v224 = vshrl.u32 %v223, 7
        %v225 = vrot.slane %v222, 7
        %v226 = vadd.s32 %v224, 4294967295
        %vm227 = vcmp.ge.s32.totalorder %v226, 0
        %vm228 = vcmp.lt.s32.totalorder %v226, 8
        %vm229 = vmand %vm227, %vm228
        %v230 = vsel %vm229, %v225, 0.0
        %v231 = vld [vmem:[%s218] sm:$0x1]
        %v232 = vperm.slane %v231, 0
        %v233 = vmul.f32 %v230, %v232
        %v234 = vadd.f32 %v233, 0.0
        %v235 = vld [vmem:[%s218 + $0x1] sm:$0x1]
        %v236 = vperm.slane %v235, 0
        %v237 = vmul.f32 %v222, %v236
        %v238 = vadd.f32 %v234, %v237
        %v239 = vrot.slane %v222, 1
        %v240 = vadd.s32 %v224, 1
        %vm241 = vcmp.ge.s32.totalorder %v240, 0
        %vm242 = vcmp.lt.s32.totalorder %v240, 8
        %vm243 = vmand %vm241, %vm242
        %v244 = vsel %vm243, %v239, 0.0
        %v245 = vld [vmem:[%s218 + $0x2] sm:$0x1]
        %v246 = vperm.slane %v245, 0
        %v247 = vmul.f32 %v244, %v246
        %v248 = vadd.f32 %v238, %v247
        %v249 = vld [vmem:[%s221] sm:$0x1]
        %v251 = vperm.slane %v249, 0
        %v253 = vadd.f32 %v248, %v251
        %v254 = vadd.f32 %v253, %v222
        %255 = vst [vmem:[%s207] sm:$0xff] %v254
        %s256 = sand.u32 %s119, 1
        %s257 = scalar_lea.sflag [#allocation3], %s256
        %s258 = sand.u32 %s119, 1
        %s259 = smul.addr %s258, 8
        %s260 = scalar_lea.vmem [#allocation2], %s259
        // Predicated region
        $region33: #{conv_pos_enc_forward.2} parent=31 // pred_check
          %p261 = pneg %p129
        $region34: #{conv_pos_enc_forward.2} parent=31 // pred_check_branch
          %263 = sbr.rel (%p261) target = $region36
        $region35: #{conv_pos_enc_forward.2} parent=31 // pred_region
          %265 = vsyncadd %s257, 0
          %s266 = sadd.s32 %s22, %s21
          %s267 = smul.addr %s266, 8
          %s268 = scalar_lea.hbm %s3, %s267
          %s270 = sshll.u32 %s260, 4
          %s271 = int_to_ptr.vmem [resolvable:$true] %s270
          %s272 = sshll.u32 %s268, 4
          %s273 = int_to_ptr.hbm [resolvable:$true] %s272
          %275 = dma.vmem_to_hbm [thread:$0]  %s271, 128, %s273, %s257
        $region36: #{conv_pos_enc_forward.2} parent=31 // pred_fallthru
          _
      $region32: #{conv_pos_enc_forward.2} parent=5 // pred_fallthru
        _
      %p276 = scmp.le.s32.totalorder 2, %s12
      // Predicated region
      $region37: #{conv_pos_enc_forward.2} parent=5 // pred_check
        %p277 = pneg %p276
      $region38: #{conv_pos_enc_forward.2} parent=5 // pred_check_branch
        %279 = sbr.rel (%p277) target = $region40
      $region39: #{conv_pos_enc_forward.2} parent=5 // pred_region
        %s280 = ssub.s32 %s12, 2
        // Predicated region
        $region41: #{conv_pos_enc_forward.2} parent=39 // pred_check
          %p281 = pneg %p135
        $region42: #{conv_pos_enc_forward.2} parent=39 // pred_check_branch
          %283 = sbr.rel (%p281) target = $region44
        $region43: #{conv_pos_enc_forward.2} parent=39 // pred_region
          %s284 = sand.u32 %s120, 1
          %s285 = scalar_lea.sflag [#allocation3], %s284
          %s286 = sand.u32 %s120, 1
          %s287 = smul.addr %s286, 8
          %s288 = scalar_lea.vmem [#allocation2], %s287
          %290 = dma.done %s285, 128
        $region44: #{conv_pos_enc_forward.2} parent=39 // pred_fallthru
          _
      $region40: #{conv_pos_enc_forward.2} parent=5 // pred_fallthru
        _
    $region6: #{conv_pos_enc_forward.2} parent=1 // loop_footer
      %s16 = sadd.s32 1, %s12
    $region7: #{conv_pos_enc_forward.2} parent=1 // loop_footer_branch
      %11 = sbr.rel target = $region3
    $region8: #{conv_pos_enc_forward.2} parent=1 // loop_exit
      _
    %291 = vsyncpa [#allocation3], 1
    %s292 = scalar_lea.sflag [#allocation3], 1
    %293 = vsyncpa %s292, 1

</llo_original>
